<compile_context>
chip_gen: v7x
topology: tpu7x:2x2x1
jax: 0.10.0
libtpu: 0.0.40
codegen_flags: <defaults>
</compile_context>

<pallas_src>
import functools

import jax
import jax.numpy as jnp
from jax import lax
from jax.experimental import pallas as pl
from jax.experimental.pallas import tpu as pltpu

EPS = 1e-5  # nn.GroupNorm default


def _conv_gn_silu_kernel(x_ref, w_ref, p_ref, o_ref, xbuf,
                         *, c_in, c_blk, half, h, w, eps):
    # x_ref : (1, C_in, H*W)        raw activation (flattened spatial)
    # w_ref : (1, half, 9*c_blk)    this group's weights, tap-stacked along K
    # p_ref : (1, 3, half, 1)       [bias, gamma, beta] for this group
    # o_ref : (1, 1, half, H*W)     this group's output (NCHW-flattened)
    # xbuf  : (c_blk, L) f32 VMEM   H-padded + guarded input plane (built here)
    hw = h * w
    l_total = (h + 2) * w + 2
    pad = w + 1

    # ---- assemble padded/flattened input plane in VMEM (no HBM pad round trip).
    # Done unconditionally every step so any megacore split of the grid is correct.
    zstrip = jnp.zeros((c_blk, pad), jnp.float32)
    xbuf[:, 0:pad] = zstrip                              # front guard + top pad row
    xbuf[:, pad + hw:l_total] = zstrip                   # bottom pad row + back guard
    if c_blk > c_in:                                     # zero the sublane-padding rows
        xbuf[c_in:c_blk, pad:pad + hw] = jnp.zeros((c_blk - c_in, hw), jnp.float32)
    xbuf[0:c_in, pad:pad + hw] = x_ref[0].astype(jnp.float32)

    xp = xbuf[...]                                       # (c_blk, L) f32

    # Column index of each flattened source position: (1, L), broadcast over sublanes.
    col = (lax.broadcasted_iota(jnp.int32, (1, l_total), 1) + (w - 1)) % w
    xp_l = jnp.where(col != (w - 1), xp, 0.0)            # for kj==0 taps (source col w-1)
    xp_r = jnp.where(col != 0, xp, 0.0)                  # for kj==2 taps (source col w+1)

    # ---- tap-stacked operand: (9*c_blk, HW); each piece is vreg-row aligned.
    pieces = []
    for ki in range(3):
        for kj in range(3):
            src = xp_l if kj == 0 else (xp_r if kj == 2 else xp)
            start = ki * w + kj                          # static lane offset
            pieces.append(src[:, start:start + hw])
    xcat = jnp.concatenate(pieces, axis=0).astype(w_ref.dtype)

    # ---- single MXU call, f32 accumulation ----
    y = jnp.dot(w_ref[0], xcat, preferred_element_type=jnp.float32)   # (half, HW)
    y = y + p_ref[0, 0]                                  # conv bias (lane broadcast)

    # ---- GroupNorm (this grid step IS one group): two-pass mean/variance, f32 ----
    inv_n = 1.0 / float(half * hw)
    mean = jnp.sum(y) * inv_n
    yc = y - mean
    var = jnp.sum(yc * yc) * inv_n                       # biased variance (GroupNorm)
    rstd = lax.rsqrt(var + eps)
    scale = p_ref[0, 1] * rstd                           # gamma folded with rstd
    z = yc * scale + p_ref[0, 2]                         # + beta

    o_ref[0, 0] = (z * jax.nn.sigmoid(z)).astype(o_ref.dtype)   # SiLU


def conv2d_layer_forward(x, weight, bias, gamma, beta, *,
                         kernel_size=3, matmul_dtype=jnp.float32,
                         out_dtype=jnp.float32):
    """Forward of Conv2d_layer (default config: stride 1, padding 1, dilation 1).

    x      : (N, C_in, H, W)   NCHW, PyTorch convention
    weight : (C_out, C_in, K, K)
    bias, gamma, beta : (C_out,)
    returns: (N, C_out, H, W) in out_dtype
    """
    assert kernel_size == 3, "only the module's default kernel_size=3 path is implemented"
    N, C_in, H, W = x.shape
    C_out = weight.shape[0]
    assert C_out % 2 == 0, "GroupNorm(2) requires even out_channels"
    half = C_out // 2
    HW = H * W
    L = (H + 2) * W + 2
    c_blk = ((C_in + 7) // 8) * 8           # per-tap rows, sublane(8)-aligned in f32
    KK = 9 * c_blk

    # ---- inputs: only a free reshape (no padded HBM round trip) ----
    x_flat = x.reshape(N, C_in, HW).astype(matmul_dtype)

    # ---- weights: (2 groups, half, 9*c_blk), tap-major K with zero-padded channels ----
    wt = weight.astype(jnp.float32).transpose(0, 2, 3, 1).reshape(C_out, 9, C_in)
    w_full = jnp.zeros((C_out, 9, c_blk), jnp.float32).at[:, :, :C_in].set(wt)
    w_g = w_full.reshape(2, half, KK).astype(matmul_dtype)

    # ---- bias/gamma/beta packed into one (2, 3, half, 1) input ----
    params = jnp.stack([bias, gamma, beta], axis=0).astype(jnp.float32)   # (3, C_out)
    params = params.reshape(3, 2, half).transpose(1, 0, 2)[..., None]     # (2, 3, half, 1)

    kern = functools.partial(_conv_gn_silu_kernel, c_in=C_in, c_blk=c_blk,
                             half=half, h=H, w=W, eps=EPS)

    # ---- VMEM budget from the actual blocks, clamped to per-core capacity ----
    it = jnp.dtype(matmul_dtype).itemsize
    ot = jnp.dtype(out_dtype).itemsize
    lp_hw = ((HW + 127) // 128) * 128
    lp_l = ((L + 127) // 128) * 128
    lp_kk = ((KK + 127) // 128) * 128
    needed = (
        2 * (C_in * lp_hw * it + half * lp_kk * it + 3 * half * 128 * 4
             + half * lp_hw * ot)                    # double-buffered in/out blocks
        + c_blk * lp_l * 4                           # xbuf scratch
        + 2 * c_blk * lp_l * 4                       # xp_l / xp_r
        + 9 * c_blk * lp_hw * (4 + it)               # stacked operand (+ cast copy)
        + 4 * half * lp_hw * 4                       # y / yc / z temporaries
        + (4 << 20)                                  # headroom
    )
    try:
        cap = int(pltpu.get_tpu_info().vmem_capacity_bytes)
    except Exception:
        cap = 64 << 20                               # conservative (v7x per-core)
    vmem_limit = int(min(max(needed, 16 << 20), max(cap - (16 << 20), 32 << 20)))

    out = pl.pallas_call(
        kern,
        out_shape=jax.ShapeDtypeStruct((N, 2, half, HW), out_dtype),
        grid_spec=pltpu.PrefetchScalarGridSpec(
            num_scalar_prefetch=0,
            grid=(N, 2),
            in_specs=[
                pl.BlockSpec((1, C_in, HW), lambda n, g: (n, 0, 0)),
                pl.BlockSpec((1, half, KK), lambda n, g: (g, 0, 0)),
                pl.BlockSpec((1, 3, half, 1), lambda n, g: (g, 0, 0, 0)),
            ],
            out_specs=pl.BlockSpec((1, 1, half, HW), lambda n, g: (n, g, 0, 0)),
            scratch_shapes=[pltpu.VMEM((c_blk, L), jnp.float32)],
        ),
        compiler_params=pltpu.CompilerParams(
            dimension_semantics=("parallel", "parallel"),
            vmem_limit_bytes=vmem_limit,
        ),
    )(x_flat, w_g, params)

    # output is already channel-major: free reshape back to NCHW
    return out.reshape(N, C_out, H, W)


def _reference(x, weight, bias, gamma, beta):
    """Pure-JAX reference (conv + GroupNorm(2) + SiLU) for validation."""
    y = lax.conv_general_dilated(
        x, weight, window_strides=(1, 1), padding=((1, 1), (1, 1)),
        dimension_numbers=("NCHW", "OIHW", "NCHW"))
    y = y + bias[None, :, None, None]
    N, C, H, W = y.shape
    yg = y.reshape(N, 2, C // 2, H, W)
    m = yg.mean(axis=(2, 3, 4), keepdims=True)
    v = ((yg - m) ** 2).mean(axis=(2, 3, 4), keepdims=True)
    yn = ((yg - m) / jnp.sqrt(v + EPS)).reshape(N, C, H, W)
    z = yn * gamma[None, :, None, None] + beta[None, :, None, None]
    return z * jax.nn.sigmoid(z)


if __name__ == "__main__":
    # Small shapes consistent with the module's forward: NCHW input.
    N, C_in, C_out, H, W, K = 2, 4, 8, 16, 16, 3

    key = jax.random.PRNGKey(0)
    kx, kw, kb, kg, kbt = jax.random.split(key, 5)

    x = jax.random.normal(kx, (N, C_in, H, W), dtype=jnp.float32)

    # Deterministic PyTorch-like parameter init (not a checkpoint load).
    fan_in = C_in * K * K
    bound = 1.0 / (fan_in ** 0.5)
    weight = jax.random.uniform(kw, (C_out, C_in, K, K), minval=-bound, maxval=bound,
                                dtype=jnp.float32)
    bias = jax.random.uniform(kb, (C_out,), minval=-bound, maxval=bound,
                              dtype=jnp.float32)
    gamma = 1.0 + 0.1 * jax.random.normal(kg, (C_out,), dtype=jnp.float32)
    beta = 0.1 * jax.random.normal(kbt, (C_out,), dtype=jnp.float32)

    y_ref = _reference(x, weight, bias, gamma, beta)

    # f32 MXU-operand path (default): tight tolerance.
    y = conv2d_layer_forward(x, weight, bias, gamma, beta, kernel_size=K)
    y = jax.block_until_ready(y)
    assert y.shape == (N, C_out, H, W)
    err = float(jnp.max(jnp.abs(y - y_ref)))
    assert jnp.allclose(y, y_ref, rtol=1e-3, atol=1e-3), f"f32 mismatch (max err {err})"

    # bf16 MXU-operand path (v6e/v7x feed rate, f32 accumulate): loose tolerance.
    y_bf = conv2d_layer_forward(x, weight, bias, gamma, beta, kernel_size=K,
                                matmul_dtype=jnp.bfloat16)
    y_bf = jax.block_until_ready(y_bf)
    err_bf = float(jnp.max(jnp.abs(y_bf - y_ref)))
    assert jnp.allclose(y_bf, y_ref, rtol=6e-2, atol=6e-2), \
        f"bf16 mismatch (max err {err_bf})"

    print("KERNEL_OK")
</pallas_src>

<mosaic_0001>
module attributes {stable_mosaic.version = 11 : i64} {
  func.func @_conv_gn_silu_kernel(%arg0: i32, %arg1: i32, %arg2: memref<1x4x256xf32, #tpu.memory_space<vmem>>, %arg3: memref<1x4x72xf32, #tpu.memory_space<vmem>>, %arg4: memref<1x3x4x1xf32, #tpu.memory_space<vmem>>, %arg5: memref<1x1x4x256xf32, #tpu.memory_space<vmem>>, %arg6: memref<8x290xf32, #tpu.memory_space<vmem>>) attributes {dimension_semantics = [#tpu.dimension_semantics<parallel>, #tpu.dimension_semantics<parallel>], iteration_bounds = array<i64: 2, 2>, scalar_prefetch = 0 : i64, scratch_operands = 1 : i64, tpu.core_type = #tpu.core_type<tc>, window_params = [{transform_indices = @transform_0, window_bounds = array<i64: 1, 4, 256>}, {transform_indices = @transform_1, window_bounds = array<i64: 1, 4, 72>}, {transform_indices = @transform_2, window_bounds = array<i64: 1, 3, 4, 1>}, {transform_indices = @transform_3, window_bounds = array<i64: 1, 1, 4, 256>}]} {
    %cst = arith.constant 0.000000e+00 : f32
    %0 = vector.broadcast %cst : f32 to vector<8x17xf32>
    %c0 = arith.constant 0 : index
    %c0_0 = arith.constant 0 : index
    %1 = vector.load %arg6[%c0, %c0_0] : memref<8x290xf32, #tpu.memory_space<vmem>>, vector<8x17xf32>
    tpu.vector_store %arg6[%c0, %c0_0], %0 {strides = array<i32>} : memref<8x290xf32, #tpu.memory_space<vmem>>, vector<8x17xf32>,
    %c0_1 = arith.constant 0 : index
    %c273 = arith.constant 273 : index
    %2 = vector.load %arg6[%c0_1, %c273] : memref<8x290xf32, #tpu.memory_space<vmem>>, vector<8x17xf32>
    tpu.vector_store %arg6[%c0_1, %c273], %0 {strides = array<i32>} : memref<8x290xf32, #tpu.memory_space<vmem>>, vector<8x17xf32>,
    %cst_2 = arith.constant 0.000000e+00 : f32
    %3 = vector.broadcast %cst_2 : f32 to vector<4x256xf32>
    %c4 = arith.constant 4 : index
    %c17 = arith.constant 17 : index
    %4 = vector.load %arg6[%c4, %c17] : memref<8x290xf32, #tpu.memory_space<vmem>>, vector<4x256xf32>
    tpu.vector_store %arg6[%c4, %c17], %3 {strides = array<i32>} : memref<8x290xf32, #tpu.memory_space<vmem>>, vector<4x256xf32>,
    %c0_3 = arith.constant 0 : index
    %c0_4 = arith.constant 0 : index
    %c0_5 = arith.constant 0 : index
    %5 = vector.load %arg2[%c0_3, %c0_4, %c0_5] : memref<1x4x256xf32, #tpu.memory_space<vmem>>, vector<1x4x256xf32>
    %6 = vector.shape_cast %5 : vector<1x4x256xf32> to vector<4x256xf32>
    %c0_6 = arith.constant 0 : index
    %c17_7 = arith.constant 17 : index
    %7 = vector.load %arg6[%c0_6, %c17_7] : memref<8x290xf32, #tpu.memory_space<vmem>>, vector<4x256xf32>
    tpu.vector_store %arg6[%c0_6, %c17_7], %6 {strides = array<i32>} : memref<8x290xf32, #tpu.memory_space<vmem>>, vector<4x256xf32>,
    %c0_8 = arith.constant 0 : index
    %c0_9 = arith.constant 0 : index
    %8 = vector.load %arg6[%c0_8, %c0_9] : memref<8x290xf32, #tpu.memory_space<vmem>>, vector<8x290xf32>
    %9 = tpu.iota {dimensions = array<i32: 1>} : vector<1x290xi32>
    %c15_i32 = arith.constant 15 : i32
    %10 = vector.broadcast %c15_i32 : i32 to vector<1x290xi32>
    %11 = arith.addi %9, %10 : vector<1x290xi32>
    %c16_i32 = arith.constant 16 : i32
    %c0_i32 = arith.constant 0 : i32
    %12 = arith.cmpi eq, %c16_i32, %c0_i32 : i32
    %c1_i32 = arith.constant 1 : i32
    %13 = arith.select %12, %c1_i32, %c16_i32 : i32
    %14 = vector.broadcast %13 : i32 to vector<1x290xi32>
    %15 = arith.remsi %11, %14 : vector<1x290xi32>
    %c0_i32_10 = arith.constant 0 : i32
    %16 = vector.broadcast %c0_i32_10 : i32 to vector<1x290xi32>
    %17 = arith.cmpi ne, %15, %16 : vector<1x290xi32>
    %c0_i32_11 = arith.constant 0 : i32
    %18 = vector.broadcast %c0_i32_11 : i32 to vector<1x290xi32>
    %19 = arith.cmpi slt, %15, %18 : vector<1x290xi32>
    %c0_i32_12 = arith.constant 0 : i32
    %20 = arith.cmpi slt, %13, %c0_i32_12 : i32
    %21 = vector.broadcast %20 : i1 to vector<1x290xi1>
    %22 = vector.broadcast %21 : vector<1x290xi1> to vector<1x290xi1>
    %23 = arith.xori %19, %22 : vector<1x290xi1>
    %24 = arith.andi %23, %17 : vector<1x290xi1>
    %25 = vector.broadcast %13 : i32 to vector<1x290xi32>
    %26 = arith.addi %15, %25 : vector<1x290xi32>
    %27 = arith.select %24, %26, %15 : vector<1x290xi1>, vector<1x290xi32>
    %c15_i32_13 = arith.constant 15 : i32
    %28 = vector.broadcast %c15_i32_13 : i32 to vector<1x290xi32>
    %29 = arith.cmpi ne, %27, %28 : vector<1x290xi32>
    %cst_14 = arith.constant 0.000000e+00 : f32
    %30 = vector.shape_cast %29 : vector<1x290xi1> to vector<1x290xi1>
    %31 = vector.broadcast %30 : vector<1x290xi1> to vector<8x290xi1>
    %32 = vector.broadcast %cst_14 : f32 to vector<8x290xf32>
    %33 = arith.select %31, %8, %32 : vector<8x290xi1>, vector<8x290xf32>
    %c0_i32_15 = arith.constant 0 : i32
    %34 = vector.broadcast %c0_i32_15 : i32 to vector<1x290xi32>
    %35 = arith.cmpi ne, %27, %34 : vector<1x290xi32>
    %cst_16 = arith.constant 0.000000e+00 : f32
    %36 = vector.shape_cast %35 : vector<1x290xi1> to vector<1x290xi1>
    %37 = vector.broadcast %36 : vector<1x290xi1> to vector<8x290xi1>
    %38 = vector.broadcast %cst_16 : f32 to vector<8x290xf32>
    %39 = arith.select %37, %8, %38 : vector<8x290xi1>, vector<8x290xf32>
    %40 = vector.extract_strided_slice %33 {offsets = [0, 0], sizes = [8, 256], strides = [1, 1]} : vector<8x290xf32> to vector<8x256xf32>
    %41 = vector.extract_strided_slice %8 {offsets = [0, 1], sizes = [8, 256], strides = [1, 1]} : vector<8x290xf32> to vector<8x256xf32>
    %42 = vector.extract_strided_slice %39 {offsets = [0, 2], sizes = [8, 256], strides = [1, 1]} : vector<8x290xf32> to vector<8x256xf32>
    %43 = vector.extract_strided_slice %33 {offsets = [0, 16], sizes = [8, 256], strides = [1, 1]} : vector<8x290xf32> to vector<8x256xf32>
    %44 = vector.extract_strided_slice %8 {offsets = [0, 17], sizes = [8, 256], strides = [1, 1]} : vector<8x290xf32> to vector<8x256xf32>
    %45 = vector.extract_strided_slice %39 {offsets = [0, 18], sizes = [8, 256], strides = [1, 1]} : vector<8x290xf32> to vector<8x256xf32>
    %46 = vector.extract_strided_slice %33 {offsets = [0, 32], sizes = [8, 256], strides = [1, 1]} : vector<8x290xf32> to vector<8x256xf32>
    %47 = vector.extract_strided_slice %8 {offsets = [0, 33], sizes = [8, 256], strides = [1, 1]} : vector<8x290xf32> to vector<8x256xf32>
    %48 = vector.extract_strided_slice %39 {offsets = [0, 34], sizes = [8, 256], strides = [1, 1]} : vector<8x290xf32> to vector<8x256xf32>
    %49 = tpu.concatenate %40, %41, %42, %43, %44, %45, %46, %47, %48 in 0 : vector<8x256xf32>, vector<8x256xf32>, vector<8x256xf32>, vector<8x256xf32>, vector<8x256xf32>, vector<8x256xf32>, vector<8x256xf32>, vector<8x256xf32>, vector<8x256xf32> -> vector<72x256xf32>
    %c0_17 = arith.constant 0 : index
    %c0_18 = arith.constant 0 : index
    %c0_19 = arith.constant 0 : index
    %50 = vector.load %arg3[%c0_17, %c0_18, %c0_19] : memref<1x4x72xf32, #tpu.memory_space<vmem>>, vector<1x4x72xf32>
    %51 = vector.shape_cast %50 : vector<1x4x72xf32> to vector<4x72xf32>
    %cst_20 = arith.constant dense<0.000000e+00> : vector<4x256xf32>
    %52 = tpu.matmul %51, %49, %cst_20 {dimension_numbers = #tpu.dot_dimension_numbers<[1], [0], [0], [1], [0, 0, 1, 1], [], []>} : vector<4x72xf32>, vector<72x256xf32>, vector<4x256xf32> -> vector<4x256xf32>
    %c0_21 = arith.constant 0 : index
    %c0_22 = arith.constant 0 : index
    %c0_23 = arith.constant 0 : index
    %c0_24 = arith.constant 0 : index
    %53 = vector.load %arg4[%c0_21, %c0_22, %c0_23, %c0_24] : memref<1x3x4x1xf32, #tpu.memory_space<vmem>>, vector<1x1x4x1xf32>
    %54 = vector.shape_cast %53 : vector<1x1x4x1xf32> to vector<4x1xf32>
    %55 = vector.broadcast %54 : vector<4x1xf32> to vector<4x256xf32>
    %56 = arith.addf %52, %55 : vector<4x256xf32>
    %57 = vector.shape_cast %56 : vector<4x256xf32> to vector<1x4x256xf32>
    %cst_25 = arith.constant dense<0.000000e+00> : vector<1xf32>
    %58 = vector.multi_reduction <add>, %57, %cst_25 [1, 2] : vector<1x4x256xf32> to vector<1xf32>
    %59 = vector.shape_cast %58 : vector<1xf32> to vector<1x1x1xf32>
    %60 = vector.extract %59[0, 0, 0] : f32 from vector<1x1x1xf32>
    %cst_26 = arith.constant 9.765625E-4 : f32
    %61 = arith.mulf %60, %cst_26 : f32
    %62 = vector.broadcast %61 : f32 to vector<4x256xf32>
    %63 = arith.subf %56, %62 : vector<4x256xf32>
    %64 = arith.mulf %63, %63 : vector<4x256xf32>
    %65 = vector.shape_cast %64 : vector<4x256xf32> to vector<1x4x256xf32>
    %cst_27 = arith.constant dense<0.000000e+00> : vector<1xf32>
    %66 = vector.multi_reduction <add>, %65, %cst_27 [1, 2] : vector<1x4x256xf32> to vector<1xf32>
    %67 = vector.shape_cast %66 : vector<1xf32> to vector<1x1x1xf32>
    %68 = vector.extract %67[0, 0, 0] : f32 from vector<1x1x1xf32>
    %cst_28 = arith.constant 9.765625E-4 : f32
    %69 = arith.mulf %68, %cst_28 : f32
    %cst_29 = arith.constant 9.99999974E-6 : f32
    %70 = arith.addf %69, %cst_29 : f32
    %71 = math.rsqrt %70 : f32
    %c0_30 = arith.constant 0 : index
    %c1 = arith.constant 1 : index
    %c0_31 = arith.constant 0 : index
    %c0_32 = arith.constant 0 : index
    %72 = vector.load %arg4[%c0_30, %c1, %c0_31, %c0_32] : memref<1x3x4x1xf32, #tpu.memory_space<vmem>>, vector<1x1x4x1xf32>
    %73 = vector.shape_cast %72 : vector<1x1x4x1xf32> to vector<4x1xf32>
    %74 = vector.broadcast %71 : f32 to vector<4x1xf32>
    %75 = arith.mulf %73, %74 : vector<4x1xf32>
    %76 = vector.broadcast %75 : vector<4x1xf32> to vector<4x256xf32>
    %77 = arith.mulf %63, %76 : vector<4x256xf32>
    %c0_33 = arith.constant 0 : index
    %c2 = arith.constant 2 : index
    %c0_34 = arith.constant 0 : index
    %c0_35 = arith.constant 0 : index
    %78 = vector.load %arg4[%c0_33, %c2, %c0_34, %c0_35] : memref<1x3x4x1xf32, #tpu.memory_space<vmem>>, vector<1x1x4x1xf32>
    %79 = vector.shape_cast %78 : vector<1x1x4x1xf32> to vector<4x1xf32>
    %80 = vector.broadcast %79 : vector<4x1xf32> to vector<4x256xf32>
    %81 = arith.addf %77, %80 : vector<4x256xf32>
    %82 = arith.negf %81 : vector<4x256xf32>
    %83 = math.exp %82 : vector<4x256xf32>
    %cst_36 = arith.constant 1.000000e+00 : f32
    %84 = vector.broadcast %cst_36 : f32 to vector<4x256xf32>
    %85 = arith.addf %84, %83 : vector<4x256xf32>
    %86 = arith.divf %84, %85 : vector<4x256xf32>
    %87 = arith.mulf %81, %86 : vector<4x256xf32>
    %c0_37 = arith.constant 0 : index
    %c0_38 = arith.constant 0 : index
    %c0_39 = arith.constant 0 : index
    %c0_40 = arith.constant 0 : index
    %88 = vector.load %arg5[%c0_37, %c0_38, %c0_39, %c0_40] : memref<1x1x4x256xf32, #tpu.memory_space<vmem>>, vector<1x1x4x256xf32>
    %89 = vector.shape_cast %88 : vector<1x1x4x256xf32> to vector<4x256xf32>
    %90 = vector.shape_cast %87 : vector<4x256xf32> to vector<1x1x4x256xf32>
    tpu.vector_store %arg5[%c0_37, %c0_38, %c0_39, %c0_40], %90 {strides = array<i32>} : memref<1x1x4x256xf32, #tpu.memory_space<vmem>>, vector<1x1x4x256xf32>,
    return
  }
  func.func @transform_0(%arg0: i32, %arg1: i32) -> (i32, i32, i32) {
    %c0_i32 = arith.constant 0 : i32
    %c0_i32_0 = arith.constant 0 : i32
    %c0_i32_1 = arith.constant 0 : i32
    return %arg0, %c0_i32, %c0_i32_0 : i32, i32, i32
  }
  func.func @transform_1(%arg0: i32, %arg1: i32) -> (i32, i32, i32) {
    %c0_i32 = arith.constant 0 : i32
    %c0_i32_0 = arith.constant 0 : i32
    %c0_i32_1 = arith.constant 0 : i32
    return %arg1, %c0_i32, %c0_i32_0 : i32, i32, i32
  }
  func.func @transform_2(%arg0: i32, %arg1: i32) -> (i32, i32, i32, i32) {
    %c0_i32 = arith.constant 0 : i32
    %c0_i32_0 = arith.constant 0 : i32
    %c0_i32_1 = arith.constant 0 : i32
    %c0_i32_2 = arith.constant 0 : i32
    return %arg1, %c0_i32, %c0_i32_0, %c0_i32_1 : i32, i32, i32, i32
  }
  func.func @transform_3(%arg0: i32, %arg1: i32) -> (i32, i32, i32, i32) {
    %c0_i32 = arith.constant 0 : i32
    %c0_i32_0 = arith.constant 0 : i32
    %c0_i32_1 = arith.constant 0 : i32
    return %arg0, %arg1, %c0_i32, %c0_i32_0 : i32, i32, i32, i32
  }
}

</mosaic_0001>

<llo_original>
// kernel: tpu_custom_call.1
$region0: #{tpu_custom_call.1}
  #allocation0 [shape = 'u32[]', space=smem, size = 0x4, offset = 0x4, fixed_abs, tag = 'smem constant byte address 0x4 - core index']
  #allocation1 [shape = 'u32[144,128]{1,0:T(1,128)}', space=vmem, size = 0x12000, scoped, tag = 'internal scratch']
  #allocation2 [shape = 'f32[8,290]{1,0:T(8,128)}', space=vmem, size = 0x3000, scoped, tag = 'scratch operand']
  %s0 = inlined_call_operand.vmem [shape: f32[2,4,256], index: 0, kind: input, shape index: {}]
  %s1 = inlined_call_operand.vmem [shape: f32[2,4,72], index: 1, kind: input, shape index: {}]
  %s2 = inlined_call_operand.vmem [shape: f32[2,3,4,1], index: 2, kind: input, shape index: {}]
  %s3 = inlined_call_operand.hbm [shape: f32[2,2,4,256], index: 3, kind: output, shape index: {}]
  %s4 = sld [smem:[#allocation0]]
  $region45: #{tpu_custom_call.1} parent=0
    _
  %s6 = ssub.s32 1, %s4
  %s7 = scalar_select 0, %s6, %s4
  $region1: #{tpu_custom_call.1} parent=0
    #allocation3 [shape = 'u8[8192]{0}', space=vmem, size = 0x2000, scoped, tag = 'output window, operand 0']
    #allocation4 [shape = 's32[2]{0}', space=sflag, size = 0x8, scoped, tag = 'scoped memory for tpu_custom_call.1']
    %8 = vsyncpa [#allocation4], 0
    %s9 = scalar_lea.sflag [#allocation4], 1
    %10 = vsyncpa %s9, 0
    loop: start=0, step=1, limit=6
    $region2: #{tpu_custom_call.1} parent=1 // loop_pre_header
      _
    $region3: #{tpu_custom_call.1} parent=1 // loop_header
      %s12 = sphi 0, %s16
      %p13 = scmp.ge.s32.totalorder %s12, 6
      %s19 = sphi 0, %s31
      %s20 = sphi 0, %s27
      %s21 = sphi 0, %s19
      %s22 = sphi 0, %s20
      %s23 = sphi 0, %s21
      %s24 = sphi 0, %s22
      %s34 = sphi 0, %s36
      %s37 = sphi 0, %s34
      %s38 = sphi 0, %s37
      %s54 = sphi 0, %s38
      %s60 = sphi 0, %s62
      %s63 = sphi 0, %s60
      %s64 = sphi 0, %s63
      %s80 = sphi 0, %s64
      %s86 = sphi 0, %s88
      %s89 = sphi 0, %s86
      %s90 = sphi 0, %s89
      %s106 = sphi 0, %s90
      %s114 = sphi 0, %s116
      %s117 = sphi 0, %s114
      %s118 = sphi 0, %s117
      %s134 = sphi 0, %s118
    $region4: #{tpu_custom_call.1} parent=1 // loop_header_branch
      %15 = sbr.rel (%p13) target = $region8
    $region5: #{tpu_custom_call.1} parent=1 // loop_body
      %s17 = ssub.s32 %s12, 1
      %s18 = ssub.s32 %s12, 2
      %s25 = sadd.s32 1, %s20
      %p26 = scmp.ge.s32.totalorder %s25, 2
      %s27 = scalar_select %p26, 0, %s25
      %s28 = sadd.s32 1, %s19
      %s29 = scalar_select %p26, %s28, %s19
      %p30 = scmp.ge.s32.totalorder %s29, 2
      %s31 = scalar_select %p30, 0, %s29
      %s32 = ssub.s32 %s19, %s31
      %p33 = scmp.eq.s32.totalorder %s32, 0
      %s35 = sadd.s32 %s34, 1
      %s36 = scalar_select %p33, %s34, %s35
      %p39 = pneg %p33
      %p40 = scmp.eq.s32.totalorder %s12, 3
      %p41 = por %p39, %p40
      %p42 = scmp.ne.s32.totalorder %s34, %s37
      %p43 = scmp.eq.s32.totalorder %s12, 0
      %p44 = por %p42, %p43
      %p45 = scmp.ne.s32.totalorder %s34, %s37
      %p46 = scmp.eq.s32.totalorder %s17, 3
      %p47 = por %p45, %p46
      %p48 = scmp.ne.s32.totalorder %s37, %s38
      %p49 = scmp.eq.s32.totalorder %s17, 0
      %p50 = por %p48, %p49
      %p51 = scmp.ne.s32.totalorder %s37, %s38
      %p52 = scmp.eq.s32.totalorder %s18, 3
      %p53 = por %p51, %p52
      %p55 = scmp.ne.s32.totalorder %s38, %s54
      %p56 = scmp.eq.s32.totalorder %s18, 0
      %p57 = por %p55, %p56
      %s58 = ssub.s32 %s20, %s27
      %p59 = scmp.eq.s32.totalorder %s58, 0
      %s61 = sadd.s32 %s60, 1
      %s62 = scalar_select %p59, %s60, %s61
      %p65 = pneg %p59
      %p66 = scmp.eq.s32.totalorder %s12, 3
      %p67 = por %p65, %p66
      %p68 = scmp.ne.s32.totalorder %s60, %s63
      %p69 = scmp.eq.s32.totalorder %s12, 0
      %p70 = por %p68, %p69
      %p71 = scmp.ne.s32.totalorder %s60, %s63
      %p72 = scmp.eq.s32.totalorder %s17, 3
      %p73 = por %p71, %p72
      %p74 = scmp.ne.s32.totalorder %s63, %s64
      %p75 = scmp.eq.s32.totalorder %s17, 0
      %p76 = por %p74, %p75
      %p77 = scmp.ne.s32.totalorder %s63, %s64
      %p78 = scmp.eq.s32.totalorder %s18, 3
      %p79 = por %p77, %p78
      %p81 = scmp.ne.s32.totalorder %s64, %s80
      %p82 = scmp.eq.s32.totalorder %s18, 0
      %p83 = por %p81, %p82
      %s84 = ssub.s32 %s20, %s27
      %p85 = scmp.eq.s32.totalorder %s84, 0
      %s87 = sadd.s32 %s86, 1
      %s88 = scalar_select %p85, %s86, %s87
      %p91 = pneg %p85
      %p92 = scmp.eq.s32.totalorder %s12, 3
      %p93 = por %p91, %p92
      %p94 = scmp.ne.s32.totalorder %s86, %s89
      %p95 = scmp.eq.s32.totalorder %s12, 0
      %p96 = por %p94, %p95
      %p97 = scmp.ne.s32.totalorder %s86, %s89
      %p98 = scmp.eq.s32.totalorder %s17, 3
      %p99 = por %p97, %p98
      %p100 = scmp.ne.s32.totalorder %s89, %s90
      %p101 = scmp.eq.s32.totalorder %s17, 0
      %p102 = por %p100, %p101
      %p103 = scmp.ne.s32.totalorder %s89, %s90
      %p104 = scmp.eq.s32.totalorder %s18, 3
      %p105 = por %p103, %p104
      %p107 = scmp.ne.s32.totalorder %s90, %s106
      %p108 = scmp.eq.s32.totalorder %s18, 0
      %p109 = por %p107, %p108
      %s110 = ssub.s32 %s19, %s31
      %s111 = ssub.s32 %s20, %s27
      %s112 = sor.u32 %s110, %s111
      %p113 = scmp.eq.s32.totalorder %s112, 0
      %s115 = sadd.s32 %s114, 1
      %s116 = scalar_select %p113, %s114, %s115
      %p119 = pneg %p113
      %p120 = scmp.eq.s32.totalorder %s12, 3
      %p121 = por %p119, %p120
      %p122 = scmp.ne.s32.totalorder %s114, %s117
      %p123 = scmp.eq.s32.totalorder %s12, 0
      %p124 = por %p122, %p123
      %p125 = scmp.ne.s32.totalorder %s114, %s117
      %p126 = scmp.eq.s32.totalorder %s17, 3
      %p127 = por %p125, %p126
      %p128 = scmp.ne.s32.totalorder %s117, %s118
      %p129 = scmp.eq.s32.totalorder %s17, 0
      %p130 = por %p128, %p129
      %p131 = scmp.ne.s32.totalorder %s117, %s118
      %p132 = scmp.eq.s32.totalorder %s18, 3
      %p133 = por %p131, %p132
      %p135 = scmp.ne.s32.totalorder %s118, %s134
      %p136 = scmp.eq.s32.totalorder %s18, 0
      %p137 = por %p135, %p136
      %p138 = scmp.le.s32.totalorder 1, %s12
      %p139 = scmp.lt.s32.totalorder %s12, 5
      %p140 = pnand %p138, %p139
      %p141 = pneg %p140
      // Predicated region
      $region9: #{tpu_custom_call.1} parent=5 // pred_check
        _
      $region10: #{tpu_custom_call.1} parent=5 // pred_check_branch
        %143 = sbr.rel (%p140) target = $region12
      $region11: #{tpu_custom_call.1} parent=5 // pred_region
        %s144 = ssub.s32 %s12, 1
      $region12: #{tpu_custom_call.1} parent=5 // pred_fallthru
        _
      %p145 = scmp.lt.s32.totalorder %s12, 4
      // Predicated region
      $region13: #{tpu_custom_call.1} parent=5 // pred_check
        %p146 = pneg %p145
      $region14: #{tpu_custom_call.1} parent=5 // pred_check_branch
        %148 = sbr.rel (%p146) target = $region16
      $region15: #{tpu_custom_call.1} parent=5 // pred_region
        // Predicated region
        $region17: #{tpu_custom_call.1} parent=15 // pred_check
          %p149 = pneg %p44
        $region18: #{tpu_custom_call.1} parent=15 // pred_check_branch
          %151 = sbr.rel (%p149) target = $region20
        $region19: #{tpu_custom_call.1} parent=15 // pred_region
          %p152 = scmp.lt.s32.totalorder %s19, 1
          %s153 = scalar_select %p152, %s19, 1
          %s154 = smul.addr %s153, 2
          %s155 = smul.addr %s154, 4
          %s156 = scalar_lea.vmem %s0, %s155
        $region20: #{tpu_custom_call.1} parent=15 // pred_fallthru
          _
        // Predicated region
        $region21: #{tpu_custom_call.1} parent=15 // pred_check
          %p157 = pneg %p70
        $region22: #{tpu_custom_call.1} parent=15 // pred_check_branch
          %159 = sbr.rel (%p157) target = $region24
        $region23: #{tpu_custom_call.1} parent=15 // pred_region
          %p160 = scmp.lt.s32.totalorder %s20, 1
          %s161 = scalar_select %p160, %s20, 1
          %s162 = smul.addr %s161, 4
          %s163 = scalar_lea.vmem %s1, %s162
        $region24: #{tpu_custom_call.1} parent=15 // pred_fallthru
          _
        // Predicated region
        $region25: #{tpu_custom_call.1} parent=15 // pred_check
          %p164 = pneg %p96
        $region26: #{tpu_custom_call.1} parent=15 // pred_check_branch
          %166 = sbr.rel (%p164) target = $region28
        $region27: #{tpu_custom_call.1} parent=15 // pred_region
          %p167 = scmp.lt.s32.totalorder %s20, 1
          %s168 = scalar_select %p167, %s20, 1
          %s169 = smul.addr %s168, 3
          %s170 = smul.addr %s169, 4
          %s171 = scalar_lea.vmem %s2, %s170
        $region28: #{tpu_custom_call.1} parent=15 // pred_fallthru
          _
      $region16: #{tpu_custom_call.1} parent=5 // pred_fallthru
        _
      %p172 = scmp.le.s32.totalorder 1, %s12
      %p173 = scmp.lt.s32.totalorder %s12, 5
      %p174 = pnand %p172, %p173
      %p175 = pneg %p174
      // Predicated region
      $region29: #{tpu_custom_call.1} parent=5 // pred_check
        _
      $region30: #{tpu_custom_call.1} parent=5 // pred_check_branch
        %177 = sbr.rel (%p174) target = $region32
      $region31: #{tpu_custom_call.1} parent=5 // pred_region
        %s178 = ssub.s32 %s12, 1
        %p179 = scmp.lt.s32.totalorder %s21, 1
        %s180 = scalar_select %p179, %s21, 1
        %s181 = smul.addr %s180, 2
        %s182 = smul.addr %s181, 4
        %s183 = scalar_lea.vmem %s0, %s182
        %p184 = pneg %p50
        %p185 = pneg %p47
        %p186 = scmp.lt.s32.totalorder %s22, 1
        %s187 = scalar_select %p186, %s22, 1
        %s188 = smul.addr %s187, 4
        %s189 = scalar_lea.vmem %s1, %s188
        %p190 = pneg %p76
        %p191 = pneg %p73
        %p192 = scmp.lt.s32.totalorder %s22, 1
        %s193 = scalar_select %p192, %s22, 1
        %s194 = smul.addr %s193, 3
        %s195 = smul.addr %s194, 4
        %s196 = scalar_lea.vmem %s2, %s195
        %p197 = pneg %p102
        %p198 = pneg %p99
        %p199 = pneg %p130
        %p200 = pneg %p127
        %s201 = sand.u32 %s117, 1
        %s202 = scalar_lea.sflag [#allocation4], %s201
        %s203 = sand.u32 %s117, 1
        %s204 = smul.addr %s203, 8
        %s205 = scalar_lea.vmem [#allocation3], %s204
        %p206 = scmp.lt.s32.totalorder %s21, 1
        %s207 = scalar_select %p206, %s21, 1
        %s208 = smul.addr %s207, 2
        %s209 = smul.addr %s208, 4
        %s210 = scalar_lea.vmem %s0, %s209
        %p211 = scmp.lt.s32.totalorder %s22, 1
        %s212 = scalar_select %p211, %s22, 1
        %s213 = smul.addr %s212, 4
        %s214 = scalar_lea.vmem %s1, %s213
        %p215 = scmp.lt.s32.totalorder %s22, 1
        %s216 = scalar_select %p215, %s22, 1
        %s217 = smul.addr %s216, 3
        %s218 = smul.addr %s217, 4
        %s219 = scalar_lea.vmem %s2, %s218
        %vm220 = vcmask 138240
        %221 = vst.msk [vmem:[#allocation2] sm:$0xff] %vm220, 0.0
        %vm222 = vcmask 277640
        %223 = vst.msk [vmem:[#allocation2 + $0x10] sm:$0xff] %vm222, 0.0
        %vm224 = vcmask 1047692
        %225 = vst.msk [vmem:[#allocation2] sm:$0xf0] %vm224, 0.0
        %226 = vst [vmem:[#allocation2 + $0x8] sm:$0xf0] 0.0
        %vm227 = vcmask 138244
        %228 = vst.msk [vmem:[#allocation2 + $0x10] sm:$0xf0] %vm227, 0.0
        %v229 = vld [vmem:[%s210] sm:$0xff]
        %v231 = vcombine.high %v229, %v229
        %232 = vrot.lane.b32.xlu0 %v229, 17
        %v233 = vpop.permute.xlu0 %232
        %234 = vrot.lane.b32.xlu0 %v231, 17
        %v235 = vpop.permute.xlu0 %234
        %v236 = vsel %vm220, %v233, %v235
        %vm240 = vcmask 1043592
        %241 = vst.msk [vmem:[#allocation2] sm:$0xf] %vm240, %v233
        %242 = vst [vmem:[#allocation2 + $0x8] sm:$0xf] %v236
        %vm243 = vcmask 134144
        %244 = vst.msk [vmem:[#allocation2 + $0x10] sm:$0xf] %vm243, %v235
        %v245 = vld [vmem:[#allocation2] sm:$0xff]
        %v246 = vld [vmem:[#allocation2 + $0x8] sm:$0xff]
        %v247 = vld [vmem:[#allocation2 + $0x10] sm:$0xff]
        %v248 = vlaneseq
        %v249 = vand.u32 %v248, 127
        %v250 = vadd.s32 %v249, 128
        %v251 = vadd.s32 %v249, 256
        %v252 = vadd.s32 %v249, 15
        %v253 = vadd.s32 %v250, 15
        %v254 = vadd.s32 %v251, 15
        %vm255 = vcmp.lt.s32.totalorder %v252, 0
        %v256 = vsub.s32 0, %v252
        %v257 = vsel %vm255, %v256, %v252
        %v258 = vshrl.u32 %v257, 4
        %v259 = vand.u32 %v257, 15
        %v260 = vsub.s32 0, %v259
        %v261 = vsel %vm255, %v260, %v259
        %vm262 = vcmp.lt.s32.totalorder %v253, 0
        %v263 = vsub.s32 0, %v253
        %v264 = vsel %vm262, %v263, %v253
        %v265 = vshrl.u32 %v264, 4
        %v266 = vand.u32 %v264, 15
        %v267 = vsub.s32 0, %v266
        %v268 = vsel %vm262, %v267, %v266
        %vm269 = vcmp.lt.s32.totalorder %v254, 0
        %v270 = vsub.s32 0, %v254
        %v271 = vsel %vm269, %v270, %v254
        %v272 = vshrl.u32 %v271, 4
        %v273 = vand.u32 %v271, 15
        %v274 = vsub.s32 0, %v273
        %v275 = vsel %vm269, %v274, %v273
        %vm276 = vcmp.ne.s32.totalorder %v261, 0
        %vm277 = vcmp.ne.s32.totalorder %v268, 0
        %vm278 = vcmp.ne.s32.totalorder %v275, 0
        %vm279 = vcmp.lt.s32.totalorder %v261, 0
        %vm280 = vcmp.lt.s32.totalorder %v268, 0
        %vm281 = vcmp.lt.s32.totalorder %v275, 0
        %vm282 = vmand %vm279, %vm276
        %vm283 = vmand %vm280, %vm277
        %vm284 = vmand %vm281, %vm278
        %v285 = vadd.s32 %v261, 16
        %v286 = vadd.s32 %v268, 16
        %v287 = vadd.s32 %v275, 16
        %v288 = vsel %vm282, %v285, %v261
        %v289 = vsel %vm283, %v286, %v268
        %v290 = vsel %vm284, %v287, %v275
        %vm291 = vcmp.ne.s32.totalorder %v288, 15
        %vm292 = vcmp.ne.s32.totalorder %v289, 15
        %vm293 = vcmp.ne.s32.totalorder %v290, 15
        %v294 = vsel %vm291, 1, 0
        %v295 = vsel %vm292, 1, 0
        %v296 = vsel %vm293, 1, 0
        %vm297 = vcmp.eq.s32.totalorder %v294, 1
        %vm298 = vcmp.eq.s32.totalorder %v295, 1
        %vm299 = vcmp.eq.s32.totalorder %v296, 1
        %v300 = vsel %vm297, %v245, 0.0
        %v301 = vsel %vm298, %v246, 0.0
        %v302 = vsel %vm299, %v247, 0.0
        %vm303 = vcmp.ne.s32.totalorder %v288, 0
        %vm304 = vcmp.ne.s32.totalorder %v289, 0
        %vm305 = vcmp.ne.s32.totalorder %v290, 0
        %v306 = vsel %vm303, 1, 0
        %v307 = vsel %vm304, 1, 0
        %v308 = vsel %vm305, 1, 0
        %vm309 = vcmp.eq.s32.totalorder %v306, 1
        %vm310 = vcmp.eq.s32.totalorder %v307, 1
        %vm311 = vcmp.eq.s32.totalorder %v308, 1
        %v312 = vsel %vm309, %v245, 0.0
        %v313 = vsel %vm310, %v246, 0.0
        %v314 = vsel %vm311, %v247, 0.0
        %318 = vrot.lane.b32.xlu0 %v245, 127
        %v319 = vpop.permute.xlu0 %318
        %320 = vrot.lane.b32.xlu0 %v246, 127
        %v321 = vpop.permute.xlu0 %320
        %322 = vrot.lane.b32.xlu0 %v247, 127
        %v323 = vpop.permute.xlu0 %322
        %vm324 = vcmask 1039360
        %v325 = vsel %vm324, %v319, %v321
        %v326 = vsel %vm324, %v321, %v323
        %332 = vrot.lane.b32.xlu0 %v312, 126
        %v333 = vpop.permute.xlu0 %332
        %334 = vrot.lane.b32.xlu0 %v313, 126
        %v335 = vpop.permute.xlu0 %334
        %336 = vrot.lane.b32.xlu0 %v314, 126
        %v337 = vpop.permute.xlu0 %336
        %vm338 = vcmask 1031168
        %v339 = vsel %vm338, %v333, %v335
        %v340 = vsel %vm338, %v335, %v337
        %346 = vrot.lane.b32.xlu0 %v300, 112
        %v347 = vpop.permute.xlu0 %346
        %348 = vrot.lane.b32.xlu0 %v301, 112
        %v349 = vpop.permute.xlu0 %348
        %350 = vrot.lane.b32.xlu0 %v302, 112
        %v351 = vpop.permute.xlu0 %350
        %vm352 = vcmask 916480
        %v353 = vsel %vm352, %v347, %v349
        %v354 = vsel %vm352, %v349, %v351
        %357 = vrot.lane.b32.xlu0 %v245, 111
        %v358 = vpop.permute.xlu0 %357
        %359 = vrot.lane.b32.xlu0 %v246, 111
        %v360 = vpop.permute.xlu0 %359
        %361 = vrot.lane.b32.xlu0 %v247, 111
        %v362 = vpop.permute.xlu0 %361
        %vm363 = vcmask 908288
        %v364 = vsel %vm363, %v358, %v360
        %v365 = vsel %vm363, %v360, %v362
        %368 = vrot.lane.b32.xlu0 %v312, 110
        %v369 = vpop.permute.xlu0 %368
        %370 = vrot.lane.b32.xlu0 %v313, 110
        %v371 = vpop.permute.xlu0 %370
        %372 = vrot.lane.b32.xlu0 %v314, 110
        %v373 = vpop.permute.xlu0 %372
        %vm374 = vcmask 900096
        %v375 = vsel %vm374, %v369, %v371
        %v376 = vsel %vm374, %v371, %v373
        %379 = vrot.lane.b32.xlu0 %v300, 96
        %v380 = vpop.permute.xlu0 %379
        %381 = vrot.lane.b32.xlu0 %v301, 96
        %v382 = vpop.permute.xlu0 %381
        %383 = vrot.lane.b32.xlu0 %v302, 96
        %v384 = vpop.permute.xlu0 %383
        %vm385 = vcmask 785408
        %v386 = vsel %vm385, %v380, %v382
        %v387 = vsel %vm385, %v382, %v384
        %390 = vrot.lane.b32.xlu0 %v245, 95
        %v391 = vpop.permute.xlu0 %390
        %392 = vrot.lane.b32.xlu0 %v246, 95
        %v393 = vpop.permute.xlu0 %392
        %394 = vrot.lane.b32.xlu0 %v247, 95
        %v395 = vpop.permute.xlu0 %394
        %vm396 = vcmask 777216
        %v397 = vsel %vm396, %v391, %v393
        %v398 = vsel %vm396, %v393, %v395
        %401 = vrot.lane.b32.xlu0 %v312, 94
        %v402 = vpop.permute.xlu0 %401
        %403 = vrot.lane.b32.xlu0 %v313, 94
        %v404 = vpop.permute.xlu0 %403
        %405 = vrot.lane.b32.xlu0 %v314, 94
        %v406 = vpop.permute.xlu0 %405
        %vm407 = vcmask 769024
        %v408 = vsel %vm407, %v402, %v404
        %v409 = vsel %vm407, %v404, %v406
        %v412 = vld [vmem:[%s214] sm:$0xf]
        %v413 = vld [vmem:[%s219] sm:$0xf]
        %415 = vset.pattern.permute.xlu0 0
        %416 = vperm.xlu0 %415, %v413
        %v417 = vpop.permute.xlu0 %416
        %vm419 = vcmask 588800
        %v421 = vsel %vm419, %v412, 0
        %423 = vmatprep.subr.mxu0 %v301
        %424 = vmatpush1.msra.mxu0 %v300
        %425 = vmatprep.subr.mxu0 %v326
        %426 = vmatpush1.msra.mxu0 %v325
        %427 = vmatprep.subr.mxu0 %v340
        %428 = vmatpush1.msra.mxu0 %v339
        %429 = vmatprep.subr.mxu0 %v354
        %430 = vmatpush1.msra.mxu0 %v353
        %431 = vmatprep.subr.mxu0 %v365
        %432 = vmatpush1.msra.mxu0 %v364
        %433 = vmatprep.subr.mxu0 %v376
        %434 = vmatpush1.msra.mxu0 %v375
        %435 = vmatprep.subr.mxu0 %v387
        %436 = vmatpush1.msra.mxu0 %v386
        %437 = vmatprep.subr.mxu0 %v398
        %438 = vmatpush1.msra.mxu0 %v397
        %439 = vmatprep.subr.mxu0 %v409
        %440 = vmatpush1.msra.mxu0 %v408
        %441 = vmatprep.subr.mxu0 0.0
        %442 = vmatpush1.msra.mxu0 0.0
        %443 = vmatprep.subr.mxu0 0.0
        %444 = vmatpush1.msra.mxu0 0.0
        %445 = vmatprep.subr.mxu0 0.0
        %446 = vmatpush1.msra.mxu0 0.0
        %447 = vmatprep.subr.mxu0 0.0
        %448 = vmatpush1.msra.mxu0 0.0
        %449 = vmatprep.subr.mxu0 0.0
        %450 = vmatpush1.msra.mxu0 0.0
        %451 = vmatprep.subr.mxu0 0.0
        %452 = vmatpush1.msra.mxu0 0.0
        %453 = vmatprep.subr.mxu0 0.0
        %454 = vmatpush1.msra.mxu0 0.0
        %455 = vmatprep.subr.mxu0 0.0
        %456 = vmatpush1.msra.mxu0 0.0
        %457 = vmatprep.subr.mxu0 0.0
        %458 = vmatpush1.msra.mxu0 0.0
        %459 = vmatprep.subr.mxu0 0.0
        %460 = vmatpush1.msra.mxu0 0.0
        %461 = vmatprep.subr.mxu0 0.0
        %462 = vmatpush1.msra.mxu0 0.0
        %463 = vmatprep.subr.mxu0 0.0
        %464 = vmatpush1.msra.mxu0 0.0
        %465 = vmatprep.subr.mxu0 0.0
        %466 = vmatpush1.msra.mxu0 0.0
        %467 = vmatprep.subr.mxu0 0.0
        %468 = vmatpush1.msra.mxu0 0.0
        %469 = vmatprep.subr.mxu0 0.0
        %470 = vmatpush1.msra.mxu0 0.0
        %471 = vmatprep.subr.mxu0 0.0
        %472 = vmatpush1.msra.mxu0 0.0
        %473 = vmatprep.subr.mxu0 0.0
        %474 = vmatpush1.msra.mxu0 0.0
        %475 = vmatprep.subr.mxu0 0.0
        %476 = vmatpush1.msra.mxu0 0.0
        %477 = vmatprep.subr.mxu0 0.0
        %478 = vmatpush1.msra.mxu0 0.0
        %479 = vmatprep.subr.mxu0 0.0
        %480 = vmatpush1.msra.mxu0 0.0
        %481 = vmatprep.subr.mxu0 0.0
        %482 = vmatpush1.msra.mxu0 0.0
        %483 = vmatprep.subr.mxu0 0.0
        %484 = vmatpush1.msra.mxu0 0.0
        %485 = vmatprep.subr.mxu0 0.0
        %486 = vmatpush1.msra.mxu0 0.0
        %487 = vmatprep.mubr.f32.mxu0 0.0
        %488 = vmatmul.mubr.f32.gmra.mrb[0].mxu0 %v421
        %v489 = vpop.f32.mrb[0].mxu0
        %v490 = vadd.f32 %v417, %v489
        %v491 = vpop.f32.mrb[0].mxu0
        %v492 = vadd.f32 %v417, %v491
        %493 = vdwg.mxu0
        %vm494 = vcmask 1043456
        %v495 = vsel %vm494, %v490, 0.0
        %v496 = vsel %vm494, %v492, 0.0
        %v497 = vadd.f32 %v495, %v496
        %498 = vadd.xlane.f32.xlu0 %v497
        %v499 = vpop.xlane.xlu0 %498
        %v500 = vrot.slane %v499, 4
        %v501 = vadd.f32 %v499, %v500
        %v502 = vrot.slane %v501, 2
        %v503 = vadd.f32 %v501, %v502
        %v504 = vrot.slane %v503, 1
        %v505 = vadd.f32 %v503, %v504
        %s506 = vtos %v505
        %s507 = smul.f32 %s506, 0.0009765625
        %v508 = vstv %s507
        %v509 = vsub.f32 %v490, %v508
        %v510 = vsub.f32 %v492, %v508
        %v511 = vmul.f32 %v509, %v509
        %v512 = vmul.f32 %v510, %v510
        %v513 = vsel %vm494, %v511, 0.0
        %v514 = vsel %vm494, %v512, 0.0
        %v515 = vadd.f32 %v513, %v514
        %516 = vadd.xlane.f32.xlu0 %v515
        %v517 = vpop.xlane.xlu0 %516
        %v518 = vrot.slane %v517, 4
        %v519 = vadd.f32 %v517, %v518
        %v520 = vrot.slane %v519, 2
        %v521 = vadd.f32 %v519, %v520
        %v522 = vrot.slane %v521, 1
        %v523 = vadd.f32 %v521, %v522
        %s524 = vtos %v523
        %s525 = smul.f32 %s524, 0.0009765625
        %s526 = sadd.f32 %s525, 1e-05
        %v527 = vstv %s526
        %v528 = vrsqrt.pop %v527
        %s529 = vtos %v528
        %s530 = scalar_lea.vmem %s219, 4
        %v531 = vld [vmem:[%s530] sm:$0xf]
        %v532 = vstv %s529
        %v533 = vmul.f32 %v531, %v532
        %535 = vset.pattern.permute.xlu0 0
        %536 = vperm.xlu0 %535, %v533
        %v537 = vpop.permute.xlu0 %536
        %v539 = vmul.f32 %v509, %v537
        %v540 = vmul.f32 %v510, %v537
        %s541 = scalar_lea.vmem %s219, 8
        %v542 = vld [vmem:[%s541] sm:$0xf]
        %544 = vset.pattern.permute.xlu0 0
        %545 = vperm.xlu0 %544, %v542
        %v546 = vpop.permute.xlu0 %545
        %v548 = vadd.f32 %v539, %v546
        %v549 = vadd.f32 %v540, %v546
        %v550 = vxor.u32 %v548, 2147483648
        %v551 = vxor.u32 %v549, 2147483648
        %v552 = vmul.f32 %v550, 1.442695
        %v553 = vpow.pop %v552
        %v554 = vmul.f32 %v551, 1.442695
        %v555 = vpow.pop %v554
        %v556 = vadd.f32 %v553, 1.0
        %v557 = vadd.f32 %v555, 1.0
        %v558 = vrcp.pop %v556
        %v559 = vmul.f32 1.0, %v558
        %v560 = vrcp.pop %v557
        %v561 = vmul.f32 1.0, %v560
        %v562 = vmul.f32 %v548, %v559
        %v563 = vmul.f32 %v549, %v561
        %v566 = vcombine.low %v562, %v563
        %568 = vst [vmem:[%s205] sm:$0xff] %v566
        %s569 = sand.u32 %s117, 1
        %s570 = scalar_lea.sflag [#allocation4], %s569
        %s571 = sand.u32 %s117, 1
        %s572 = smul.addr %s571, 8
        %s573 = scalar_lea.vmem [#allocation3], %s572
        // Predicated region
        $region33: #{tpu_custom_call.1} parent=31 // pred_check
          %p574 = pneg %p127
        $region34: #{tpu_custom_call.1} parent=31 // pred_check_branch
          %576 = sbr.rel (%p574) target = $region36
        $region35: #{tpu_custom_call.1} parent=31 // pred_region
          %s578 = ssub.s32 128, 128
          %579 = vsyncadd %s570, %s578
          %s580 = smul.addr %s22, 2
          %s581 = smul.addr %s21, 4
          %s582 = sadd.s32 %s580, %s581
          %s583 = smul.addr %s582, 64
          %s584 = scalar_lea.hbm %s3, %s583
          %s586 = sshll.u32 %s573, 4
          %s587 = int_to_ptr.vmem [resolvable:$true] %s586
          %589 = dma.vmem_to_hbm [thread:$0]  %s587, 128, %s584, %s570
        $region36: #{tpu_custom_call.1} parent=31 // pred_fallthru
          _
      $region32: #{tpu_custom_call.1} parent=5 // pred_fallthru
        _
      %p590 = scmp.le.s32.totalorder 2, %s12
      // Predicated region
      $region37: #{tpu_custom_call.1} parent=5 // pred_check
        %p591 = pneg %p590
      $region38: #{tpu_custom_call.1} parent=5 // pred_check_branch
        %593 = sbr.rel (%p591) target = $region40
      $region39: #{tpu_custom_call.1} parent=5 // pred_region
        %s594 = ssub.s32 %s12, 2
        // Predicated region
        $region41: #{tpu_custom_call.1} parent=39 // pred_check
          %p595 = pneg %p133
        $region42: #{tpu_custom_call.1} parent=39 // pred_check_branch
          %597 = sbr.rel (%p595) target = $region44
        $region43: #{tpu_custom_call.1} parent=39 // pred_region
          %s598 = sand.u32 %s118, 1
          %s599 = scalar_lea.sflag [#allocation4], %s598
          %s600 = sand.u32 %s118, 1
          %s601 = smul.addr %s600, 8
          %s602 = scalar_lea.vmem [#allocation3], %s601
          %603 = dma.done %s599, 128
        $region44: #{tpu_custom_call.1} parent=39 // pred_fallthru
          _
      $region40: #{tpu_custom_call.1} parent=5 // pred_fallthru
        _
    $region6: #{tpu_custom_call.1} parent=1 // loop_footer
      %s16 = sadd.s32 1, %s12
    $region7: #{tpu_custom_call.1} parent=1 // loop_footer_branch
      %11 = sbr.rel target = $region3
    $region8: #{tpu_custom_call.1} parent=1 // loop_exit
      _
    %604 = vsyncpa [#allocation4], 1
    %s605 = scalar_lea.sflag [#allocation4], 1
    %606 = vsyncpa %s605, 1

</llo_original>
